<compile_context>
chip_gen: v5e
topology: v5e:2x2
jax: 0.10.0
libtpu: 0.0.40
codegen_flags: <defaults>
</compile_context>

<pallas_src>
import functools

import jax
import jax.numpy as jnp
from jax import lax
from jax.experimental import pallas as pl
from jax.experimental.pallas import tpu as pltpu

INPUT_SIZE = 1
HIDDEN_SIZE = 5
OUT_SIZE = 1

H_PAD = 128      # lane-aligned hidden/feature width
SUBLANE = 8


def _round_up(x, m):
    return (x + m - 1) // m * m


# ---------------------------------------------------------------------------
# Kernel: one time-tile per grid step; hidden state carried in VMEM scratch.
# ---------------------------------------------------------------------------
def _rnn_kernel(x_ref, wih_ref, whh_ref, bias_ref, wlin_ref, blin_ref,
                out_ref, h_ref, pre_ref, *, t_tile, t_total, b_rows, unroll):
    # x_ref    : (t_tile*b_rows, 1)   compact time-major input column (row = t*b_rows + b)
    # wih_ref  : (1, H_PAD)           W_ih row (input_size == 1), zero padded
    # whh_ref  : (H_PAD, H_PAD)       W_hh^T, zero padded
    # bias_ref : (1, H_PAD)           b_ih + b_hh, zero padded
    # wlin_ref : (H_PAD, H_PAD)       W_lin^T in [:HIDDEN, :OUT], zero padded
    # blin_ref : (1, H_PAD)           b_lin in [:, :OUT], zero padded
    # out_ref  : (b_rows, H_PAD)      result, real output in [:B, :OUT]
    # h_ref    : (b_rows, H_PAD)      carried hidden state (scratch)
    # pre_ref  : (t_tile*b_rows, H_PAD) hoisted input projection (scratch)
    i = pl.program_id(0)

    @pl.when(i == 0)
    def _init():
        h_ref[...] = jnp.zeros_like(h_ref)

    # ---- Hoisted, time-parallel input projection + fused bias for the whole tile.
    # pre[t*b_rows + b, h] = x[t, b] * W_ih[h, 0] + (b_ih + b_hh)[h]
    pre_ref[...] = x_ref[...] * wih_ref[...] + bias_ref[...]

    whh = whh_ref[...]
    t_base = i * t_tile
    needs_mask = (t_total % t_tile) != 0   # static (trace-time) decision

    def step(t, h):
        row = pl.multiple_of(t * b_rows, SUBLANE)
        pre_t = pre_ref[pl.ds(row, b_rows), :]                       # (b_rows, H_PAD)
        h_new = jnp.tanh(
            pre_t + jnp.dot(h, whh, preferred_element_type=jnp.float32)
        )
        if needs_mask:  # only the tail tile ever has padded timesteps
            h_new = jnp.where(t_base + t < t_total, h_new, h)
        return h_new

    h = lax.fori_loop(0, t_tile, step, h_ref[...], unroll=unroll)
    h_ref[...] = h

    @pl.when(i == pl.num_programs(0) - 1)
    def _final():
        out_ref[...] = (
            jnp.dot(h, wlin_ref[...], preferred_element_type=jnp.float32)
            + blin_ref[...]
        )


# ---------------------------------------------------------------------------
# Wrapper: compact packing in plain JAX, time-tiled pallas_call, slice result.
# ---------------------------------------------------------------------------
def rnn_forward(x, w_ih, w_hh, b_ih, b_hh, w_lin, b_lin, *, t_tile_max=512):
    """x: (B, T, 1) float32. Returns (B, 1) float32 (same as the PyTorch module)."""
    B, T, I = x.shape
    assert I == INPUT_SIZE

    b_rows = max(SUBLANE, _round_up(B, SUBLANE))
    t_tile = min(t_tile_max, _round_up(T, SUBLANE))
    num_tiles = pl.cdiv(T, t_tile)
    t_pad = num_tiles * t_tile
    unroll = min(8, t_tile)

    # Compact time-major input column: row index = t * b_rows + b, one feature.
    x_tm = jnp.transpose(x.astype(jnp.float32), (1, 0, 2))          # (T, B, 1)
    x_col = jnp.zeros((t_pad, b_rows, 1), jnp.float32).at[:T, :B, :].set(x_tm)
    x_col = x_col.reshape(t_pad * b_rows, 1)

    # Padded parameters (stored transposed -> row-vector matmuls in-kernel).
    wih_row = jnp.zeros((1, H_PAD), jnp.float32).at[0, :HIDDEN_SIZE].set(w_ih[:, 0])
    whh_pad = jnp.zeros((H_PAD, H_PAD), jnp.float32).at[:HIDDEN_SIZE, :HIDDEN_SIZE].set(w_hh.T)
    bias_pad = jnp.zeros((1, H_PAD), jnp.float32).at[0, :HIDDEN_SIZE].set(b_ih + b_hh)
    wlin_pad = jnp.zeros((H_PAD, H_PAD), jnp.float32).at[:HIDDEN_SIZE, :OUT_SIZE].set(w_lin.T)
    blin_pad = jnp.zeros((1, H_PAD), jnp.float32).at[0, :OUT_SIZE].set(b_lin)

    kernel = functools.partial(
        _rnn_kernel, t_tile=t_tile, t_total=T, b_rows=b_rows, unroll=unroll
    )

    out_pad = pl.pallas_call(
        kernel,
        out_shape=jax.ShapeDtypeStruct((b_rows, H_PAD), jnp.float32),
        grid_spec=pltpu.PrefetchScalarGridSpec(
            num_scalar_prefetch=0,
            grid=(num_tiles,),
            in_specs=[
                pl.BlockSpec((t_tile * b_rows, 1), lambda i: (i, 0)),  # x column tile
                pl.BlockSpec((1, H_PAD), lambda i: (0, 0)),            # W_ih row
                pl.BlockSpec((H_PAD, H_PAD), lambda i: (0, 0)),        # W_hh^T
                pl.BlockSpec((1, H_PAD), lambda i: (0, 0)),            # fused bias
                pl.BlockSpec((H_PAD, H_PAD), lambda i: (0, 0)),        # W_lin^T
                pl.BlockSpec((1, H_PAD), lambda i: (0, 0)),            # b_lin
            ],
            out_specs=pl.BlockSpec((b_rows, H_PAD), lambda i: (0, 0)),
            scratch_shapes=[
                pltpu.VMEM((b_rows, H_PAD), jnp.float32),              # carried hidden state
                pltpu.VMEM((t_tile * b_rows, H_PAD), jnp.float32),     # hoisted projection
            ],
        ),
        compiler_params=pltpu.CompilerParams(
            # Time axis is a true recurrence -> sequential.
            # TODO(synk): for very large batches, add a leading batch grid axis
            # marked "parallel" to shard across v7x's two TensorCores.
            dimension_semantics=("arbitrary",),
        ),
    )(x_col, wih_row, whh_pad, bias_pad, wlin_pad, blin_pad)

    return out_pad[:B, :OUT_SIZE]


# ---------------------------------------------------------------------------
# Pure-JAX reference (mirrors PyTorch nn.RNN + nn.Linear forward).
# ---------------------------------------------------------------------------
def rnn_forward_ref(x, w_ih, w_hh, b_ih, b_hh, w_lin, b_lin):
    B, T, _ = x.shape
    h = jnp.zeros((B, HIDDEN_SIZE), jnp.float32)
    for t in range(T):
        h = jnp.tanh(x[:, t, :] @ w_ih.T + b_ih + h @ w_hh.T + b_hh)
    return h @ w_lin.T + b_lin


def _make_params(key):
    k1, k2, k3, k4, k5, k6 = jax.random.split(key, 6)
    bound = 1.0 / (HIDDEN_SIZE ** 0.5)
    w_ih = jax.random.uniform(k1, (HIDDEN_SIZE, INPUT_SIZE), jnp.float32, -bound, bound)
    w_hh = jax.random.uniform(k2, (HIDDEN_SIZE, HIDDEN_SIZE), jnp.float32, -bound, bound)
    b_ih = jax.random.uniform(k3, (HIDDEN_SIZE,), jnp.float32, -bound, bound)
    b_hh = jax.random.uniform(k4, (HIDDEN_SIZE,), jnp.float32, -bound, bound)
    w_lin = jax.random.uniform(k5, (OUT_SIZE, HIDDEN_SIZE), jnp.float32, -bound, bound)
    b_lin = jax.random.uniform(k6, (OUT_SIZE,), jnp.float32, -bound, bound)
    return w_ih, w_hh, b_ih, b_hh, w_lin, b_lin


if __name__ == "__main__":
    key = jax.random.PRNGKey(0)
    k_params, k_x1, k_x2 = jax.random.split(key, 3)
    params = _make_params(k_params)

    # --- Test 1: small shapes matching the module usage (batch=2, seq=8, feat=1) ---
    B1, T1 = 2, 8
    x1 = jax.random.normal(k_x1, (B1, T1, INPUT_SIZE), dtype=jnp.float32)
    out1 = jax.block_until_ready(rnn_forward(x1, *params))
    ref1 = rnn_forward_ref(x1, *params)
    assert out1.shape == (B1, OUT_SIZE), out1.shape
    assert jnp.allclose(out1, ref1, rtol=1e-4, atol=1e-4), (out1, ref1)

    # --- Test 2: longer sequence exercising the time-tiled grid + tail masking ---
    B2, T2 = 3, 300
    x2 = jax.random.normal(k_x2, (B2, T2, INPUT_SIZE), dtype=jnp.float32)
    out2 = jax.block_until_ready(rnn_forward(x2, *params, t_tile_max=128))
    ref2 = rnn_forward_ref(x2, *params)
    assert out2.shape == (B2, OUT_SIZE), out2.shape
    assert jnp.allclose(out2, ref2, rtol=1e-4, atol=1e-4), (out2, ref2)

    print("KERNEL_OK")
</pallas_src>

<mosaic_0001>
module attributes {stable_mosaic.version = 11 : i64} {
  func.func @_rnn_kernel(%arg0: i32, %arg1: memref<64x1xf32, #tpu.memory_space<vmem>>, %arg2: memref<1x128xf32, #tpu.memory_space<vmem>>, %arg3: memref<128x128xf32, #tpu.memory_space<vmem>>, %arg4: memref<1x128xf32, #tpu.memory_space<vmem>>, %arg5: memref<128x128xf32, #tpu.memory_space<vmem>>, %arg6: memref<1x128xf32, #tpu.memory_space<vmem>>, %arg7: memref<8x128xf32, #tpu.memory_space<vmem>>, %arg8: memref<8x128xf32, #tpu.memory_space<vmem>>, %arg9: memref<64x128xf32, #tpu.memory_space<vmem>>) attributes {dimension_semantics = [#tpu.dimension_semantics<arbitrary>], iteration_bounds = array<i64: 1>, scalar_prefetch = 0 : i64, scratch_operands = 2 : i64, tpu.core_type = #tpu.core_type<tc>, window_params = [{transform_indices = @transform_0, window_bounds = array<i64: 64, 1>}, {pipeline_mode = #tpu.pipeline_mode<synchronous>, transform_indices = @transform_1, window_bounds = array<i64: 1, 128>}, {pipeline_mode = #tpu.pipeline_mode<synchronous>, transform_indices = @transform_2, window_bounds = array<i64: 128, 128>}, {pipeline_mode = #tpu.pipeline_mode<synchronous>, transform_indices = @transform_3, window_bounds = array<i64: 1, 128>}, {pipeline_mode = #tpu.pipeline_mode<synchronous>, transform_indices = @transform_4, window_bounds = array<i64: 128, 128>}, {pipeline_mode = #tpu.pipeline_mode<synchronous>, transform_indices = @transform_5, window_bounds = array<i64: 1, 128>}, {pipeline_mode = #tpu.pipeline_mode<synchronous>, transform_indices = @transform_6, window_bounds = array<i64: 8, 128>}]} {
    %c0_i32 = arith.constant 0 : i32
    %0 = arith.cmpi eq, %arg0, %c0_i32 : i32
    %1 = arith.extui %0 : i1 to i32
    %c0_i32_0 = arith.constant 0 : i32
    %2 = arith.cmpi ne, %1, %c0_i32_0 : i32
    scf.if %2 {
      %cst_40 = arith.constant 0.000000e+00 : f32
      %74 = vector.broadcast %cst_40 : f32 to vector<8x128xf32>
      %c0_41 = arith.constant 0 : index
      %c0_42 = arith.constant 0 : index
      %75 = vector.load %arg8[%c0_41, %c0_42] : memref<8x128xf32, #tpu.memory_space<vmem>>, vector<8x128xf32>
      tpu.vector_store %arg8[%c0_41, %c0_42], %74 {strides = array<i32>} : memref<8x128xf32, #tpu.memory_space<vmem>>, vector<8x128xf32>,
    } else {
    }
    %c0 = arith.constant 0 : index
    %c0_1 = arith.constant 0 : index
    %3 = vector.load %arg1[%c0, %c0_1] : memref<64x1xf32, #tpu.memory_space<vmem>>, vector<64x1xf32>
    %c0_2 = arith.constant 0 : index
    %c0_3 = arith.constant 0 : index
    %4 = vector.load %arg2[%c0_2, %c0_3] : memref<1x128xf32, #tpu.memory_space<vmem>>, vector<1x128xf32>
    %5 = vector.broadcast %3 : vector<64x1xf32> to vector<64x128xf32>
    %6 = vector.broadcast %4 : vector<1x128xf32> to vector<64x128xf32>
    %7 = arith.mulf %5, %6 : vector<64x128xf32>
    %c0_4 = arith.constant 0 : index
    %c0_5 = arith.constant 0 : index
    %8 = vector.load %arg4[%c0_4, %c0_5] : memref<1x128xf32, #tpu.memory_space<vmem>>, vector<1x128xf32>
    %9 = vector.broadcast %8 : vector<1x128xf32> to vector<64x128xf32>
    %10 = arith.addf %7, %9 : vector<64x128xf32>
    %c0_6 = arith.constant 0 : index
    %c0_7 = arith.constant 0 : index
    %11 = vector.load %arg9[%c0_6, %c0_7] : memref<64x128xf32, #tpu.memory_space<vmem>>, vector<64x128xf32>
    tpu.vector_store %arg9[%c0_6, %c0_7], %10 {strides = array<i32>} : memref<64x128xf32, #tpu.memory_space<vmem>>, vector<64x128xf32>,
    %c0_8 = arith.constant 0 : index
    %c0_9 = arith.constant 0 : index
    %12 = vector.load %arg3[%c0_8, %c0_9] : memref<128x128xf32, #tpu.memory_space<vmem>>, vector<128x128xf32>
    %c0_10 = arith.constant 0 : index
    %c0_11 = arith.constant 0 : index
    %13 = vector.load %arg8[%c0_10, %c0_11] : memref<8x128xf32, #tpu.memory_space<vmem>>, vector<8x128xf32>
    %c0_i32_12 = arith.constant 0 : i32
    %c8_i32 = arith.constant 8 : i32
    %14 = arith.muli %c0_i32_12, %c8_i32 : i32
    %15 = tpu.assume_multiple %14, 8 : i32
    %16 = arith.index_cast %15 : i32 to index
    %c0_13 = arith.constant 0 : index
    %17 = vector.load %arg9[%16, %c0_13] : memref<64x128xf32, #tpu.memory_space<vmem>>, vector<8x128xf32>
    %cst = arith.constant dense<0.000000e+00> : vector<8x128xf32>
    %18 = tpu.matmul %13, %12, %cst {dimension_numbers = #tpu.dot_dimension_numbers<[1], [0], [0], [1], [0, 0, 1, 1], [], []>} : vector<8x128xf32>, vector<128x128xf32>, vector<8x128xf32> -> vector<8x128xf32>
    %19 = arith.addf %17, %18 : vector<8x128xf32>
    %20 = math.tanh %19 : vector<8x128xf32>
    %c1_i32 = arith.constant 1 : i32
    %c8_i32_14 = arith.constant 8 : i32
    %21 = arith.muli %c1_i32, %c8_i32_14 : i32
    %22 = tpu.assume_multiple %21, 8 : i32
    %23 = arith.index_cast %22 : i32 to index
    %c0_15 = arith.constant 0 : index
    %24 = vector.load %arg9[%23, %c0_15] : memref<64x128xf32, #tpu.memory_space<vmem>>, vector<8x128xf32>
    %cst_16 = arith.constant dense<0.000000e+00> : vector<8x128xf32>
    %25 = tpu.matmul %20, %12, %cst_16 {dimension_numbers = #tpu.dot_dimension_numbers<[1], [0], [0], [1], [0, 0, 1, 1], [], []>} : vector<8x128xf32>, vector<128x128xf32>, vector<8x128xf32> -> vector<8x128xf32>
    %26 = arith.addf %24, %25 : vector<8x128xf32>
    %27 = math.tanh %26 : vector<8x128xf32>
    %c2_i32 = arith.constant 2 : i32
    %c8_i32_17 = arith.constant 8 : i32
    %28 = arith.muli %c2_i32, %c8_i32_17 : i32
    %29 = tpu.assume_multiple %28, 8 : i32
    %30 = arith.index_cast %29 : i32 to index
    %c0_18 = arith.constant 0 : index
    %31 = vector.load %arg9[%30, %c0_18] : memref<64x128xf32, #tpu.memory_space<vmem>>, vector<8x128xf32>
    %cst_19 = arith.constant dense<0.000000e+00> : vector<8x128xf32>
    %32 = tpu.matmul %27, %12, %cst_19 {dimension_numbers = #tpu.dot_dimension_numbers<[1], [0], [0], [1], [0, 0, 1, 1], [], []>} : vector<8x128xf32>, vector<128x128xf32>, vector<8x128xf32> -> vector<8x128xf32>
    %33 = arith.addf %31, %32 : vector<8x128xf32>
    %34 = math.tanh %33 : vector<8x128xf32>
    %c3_i32 = arith.constant 3 : i32
    %c8_i32_20 = arith.constant 8 : i32
    %35 = arith.muli %c3_i32, %c8_i32_20 : i32
    %36 = tpu.assume_multiple %35, 8 : i32
    %37 = arith.index_cast %36 : i32 to index
    %c0_21 = arith.constant 0 : index
    %38 = vector.load %arg9[%37, %c0_21] : memref<64x128xf32, #tpu.memory_space<vmem>>, vector<8x128xf32>
    %cst_22 = arith.constant dense<0.000000e+00> : vector<8x128xf32>
    %39 = tpu.matmul %34, %12, %cst_22 {dimension_numbers = #tpu.dot_dimension_numbers<[1], [0], [0], [1], [0, 0, 1, 1], [], []>} : vector<8x128xf32>, vector<128x128xf32>, vector<8x128xf32> -> vector<8x128xf32>
    %40 = arith.addf %38, %39 : vector<8x128xf32>
    %41 = math.tanh %40 : vector<8x128xf32>
    %c4_i32 = arith.constant 4 : i32
    %c8_i32_23 = arith.constant 8 : i32
    %42 = arith.muli %c4_i32, %c8_i32_23 : i32
    %43 = tpu.assume_multiple %42, 8 : i32
    %44 = arith.index_cast %43 : i32 to index
    %c0_24 = arith.constant 0 : index
    %45 = vector.load %arg9[%44, %c0_24] : memref<64x128xf32, #tpu.memory_space<vmem>>, vector<8x128xf32>
    %cst_25 = arith.constant dense<0.000000e+00> : vector<8x128xf32>
    %46 = tpu.matmul %41, %12, %cst_25 {dimension_numbers = #tpu.dot_dimension_numbers<[1], [0], [0], [1], [0, 0, 1, 1], [], []>} : vector<8x128xf32>, vector<128x128xf32>, vector<8x128xf32> -> vector<8x128xf32>
    %47 = arith.addf %45, %46 : vector<8x128xf32>
    %48 = math.tanh %47 : vector<8x128xf32>
    %c5_i32 = arith.constant 5 : i32
    %c8_i32_26 = arith.constant 8 : i32
    %49 = arith.muli %c5_i32, %c8_i32_26 : i32
    %50 = tpu.assume_multiple %49, 8 : i32
    %51 = arith.index_cast %50 : i32 to index
    %c0_27 = arith.constant 0 : index
    %52 = vector.load %arg9[%51, %c0_27] : memref<64x128xf32, #tpu.memory_space<vmem>>, vector<8x128xf32>
    %cst_28 = arith.constant dense<0.000000e+00> : vector<8x128xf32>
    %53 = tpu.matmul %48, %12, %cst_28 {dimension_numbers = #tpu.dot_dimension_numbers<[1], [0], [0], [1], [0, 0, 1, 1], [], []>} : vector<8x128xf32>, vector<128x128xf32>, vector<8x128xf32> -> vector<8x128xf32>
    %54 = arith.addf %52, %53 : vector<8x128xf32>
    %55 = math.tanh %54 : vector<8x128xf32>
    %c6_i32 = arith.constant 6 : i32
    %c8_i32_29 = arith.constant 8 : i32
    %56 = arith.muli %c6_i32, %c8_i32_29 : i32
    %57 = tpu.assume_multiple %56, 8 : i32
    %58 = arith.index_cast %57 : i32 to index
    %c0_30 = arith.constant 0 : index
    %59 = vector.load %arg9[%58, %c0_30] : memref<64x128xf32, #tpu.memory_space<vmem>>, vector<8x128xf32>
    %cst_31 = arith.constant dense<0.000000e+00> : vector<8x128xf32>
    %60 = tpu.matmul %55, %12, %cst_31 {dimension_numbers = #tpu.dot_dimension_numbers<[1], [0], [0], [1], [0, 0, 1, 1], [], []>} : vector<8x128xf32>, vector<128x128xf32>, vector<8x128xf32> -> vector<8x128xf32>
    %61 = arith.addf %59, %60 : vector<8x128xf32>
    %62 = math.tanh %61 : vector<8x128xf32>
    %c7_i32 = arith.constant 7 : i32
    %c8_i32_32 = arith.constant 8 : i32
    %63 = arith.muli %c7_i32, %c8_i32_32 : i32
    %64 = tpu.assume_multiple %63, 8 : i32
    %65 = arith.index_cast %64 : i32 to index
    %c0_33 = arith.constant 0 : index
    %66 = vector.load %arg9[%65, %c0_33] : memref<64x128xf32, #tpu.memory_space<vmem>>, vector<8x128xf32>
    %cst_34 = arith.constant dense<0.000000e+00> : vector<8x128xf32>
    %67 = tpu.matmul %62, %12, %cst_34 {dimension_numbers = #tpu.dot_dimension_numbers<[1], [0], [0], [1], [0, 0, 1, 1], [], []>} : vector<8x128xf32>, vector<128x128xf32>, vector<8x128xf32> -> vector<8x128xf32>
    %68 = arith.addf %66, %67 : vector<8x128xf32>
    %69 = math.tanh %68 : vector<8x128xf32>
    %c8_i32_35 = arith.constant 8 : i32
    %c0_36 = arith.constant 0 : index
    %c0_37 = arith.constant 0 : index
    %70 = vector.load %arg8[%c0_36, %c0_37] : memref<8x128xf32, #tpu.memory_space<vmem>>, vector<8x128xf32>
    tpu.vector_store %arg8[%c0_36, %c0_37], %69 {strides = array<i32>} : memref<8x128xf32, #tpu.memory_space<vmem>>, vector<8x128xf32>,
    %c0_i32_38 = arith.constant 0 : i32
    %71 = arith.cmpi eq, %arg0, %c0_i32_38 : i32
    %72 = arith.extui %71 : i1 to i32
    %c0_i32_39 = arith.constant 0 : i32
    %73 = arith.cmpi ne, %72, %c0_i32_39 : i32
    scf.if %73 {
      %c0_40 = arith.constant 0 : index
      %c0_41 = arith.constant 0 : index
      %74 = vector.load %arg5[%c0_40, %c0_41] : memref<128x128xf32, #tpu.memory_space<vmem>>, vector<128x128xf32>
      %cst_42 = arith.constant dense<0.000000e+00> : vector<8x128xf32>
      %75 = tpu.matmul %69, %74, %cst_42 {dimension_numbers = #tpu.dot_dimension_numbers<[1], [0], [0], [1], [0, 0, 1, 1], [], []>} : vector<8x128xf32>, vector<128x128xf32>, vector<8x128xf32> -> vector<8x128xf32>
      %c0_43 = arith.constant 0 : index
      %c0_44 = arith.constant 0 : index
      %76 = vector.load %arg6[%c0_43, %c0_44] : memref<1x128xf32, #tpu.memory_space<vmem>>, vector<1x128xf32>
      %77 = vector.broadcast %76 : vector<1x128xf32> to vector<8x128xf32>
      %78 = arith.addf %75, %77 : vector<8x128xf32>
      %c0_45 = arith.constant 0 : index
      %c0_46 = arith.constant 0 : index
      %79 = vector.load %arg7[%c0_45, %c0_46] : memref<8x128xf32, #tpu.memory_space<vmem>>, vector<8x128xf32>
      tpu.vector_store %arg7[%c0_45, %c0_46], %78 {strides = array<i32>} : memref<8x128xf32, #tpu.memory_space<vmem>>, vector<8x128xf32>,
    } else {
    }
    return
  }
  func.func @transform_0(%arg0: i32) -> (i32, i32) {
    %c0_i32 = arith.constant 0 : i32
    %c0_i32_0 = arith.constant 0 : i32
    return %arg0, %c0_i32 : i32, i32
  }
  func.func @transform_1(%arg0: i32) -> (i32, i32) {
    %c0_i32 = arith.constant 0 : i32
    %c0_i32_0 = arith.constant 0 : i32
    %c0_i32_1 = arith.constant 0 : i32
    return %c0_i32, %c0_i32_0 : i32, i32
  }
  func.func @transform_2(%arg0: i32) -> (i32, i32) {
    %c0_i32 = arith.constant 0 : i32
    %c0_i32_0 = arith.constant 0 : i32
    %c0_i32_1 = arith.constant 0 : i32
    return %c0_i32, %c0_i32_0 : i32, i32
  }
  func.func @transform_3(%arg0: i32) -> (i32, i32) {
    %c0_i32 = arith.constant 0 : i32
    %c0_i32_0 = arith.constant 0 : i32
    %c0_i32_1 = arith.constant 0 : i32
    return %c0_i32, %c0_i32_0 : i32, i32
  }
  func.func @transform_4(%arg0: i32) -> (i32, i32) {
    %c0_i32 = arith.constant 0 : i32
    %c0_i32_0 = arith.constant 0 : i32
    %c0_i32_1 = arith.constant 0 : i32
    return %c0_i32, %c0_i32_0 : i32, i32
  }
  func.func @transform_5(%arg0: i32) -> (i32, i32) {
    %c0_i32 = arith.constant 0 : i32
    %c0_i32_0 = arith.constant 0 : i32
    %c0_i32_1 = arith.constant 0 : i32
    return %c0_i32, %c0_i32_0 : i32, i32
  }
  func.func @transform_6(%arg0: i32) -> (i32, i32) {
    %c0_i32 = arith.constant 0 : i32
    %c0_i32_0 = arith.constant 0 : i32
    %c0_i32_1 = arith.constant 0 : i32
    return %c0_i32, %c0_i32_0 : i32, i32
  }
}

</mosaic_0001>

<llo_original>
// kernel: tpu_custom_call.1
$region0: #{tpu_custom_call.1}
  #allocation0 [shape = 'u32[]', space=smem, size = 0x4, offset = 0x4, fixed_abs, tag = 'smem constant byte address 0x4 - core index']
  #allocation1 [shape = 'u32[72,128]{1,0:T(1,128)}', space=vmem, size = 0x9000, scoped, tag = 'internal scratch']
  #allocation2 [shape = 'f32[8,128]{1,0:T(8,128)}', space=vmem, size = 0x1000, scoped, tag = 'scratch operand']
  #allocation3 [shape = 'f32[64,128]{1,0:T(8,128)}', space=vmem, size = 0x8000, scoped, tag = 'scratch operand']
  %s0 = inlined_call_operand.vmem [shape: f32[64,1], index: 0, kind: input, shape index: {}]
  %s1 = inlined_call_operand.vmem [shape: f32[1,128], index: 1, kind: input, shape index: {}]
  %s2 = inlined_call_operand.hbm [shape: f32[128,128], index: 2, kind: input, shape index: {}]
  %s3 = inlined_call_operand.vmem [shape: f32[1,128], index: 3, kind: input, shape index: {}]
  %s4 = inlined_call_operand.hbm [shape: f32[128,128], index: 4, kind: input, shape index: {}]
  %s5 = inlined_call_operand.vmem [shape: f32[1,128], index: 5, kind: input, shape index: {}]
  %s6 = inlined_call_operand.hbm [shape: f32[8,128], index: 6, kind: output, shape index: {}]
  %s7 = sld [smem:[#allocation0]]
  $region50: #{tpu_custom_call.1} parent=0
    _
  %s9 = ssub.s32 1, %s7
  %s10 = scalar_select 0, %s9, %s7
  $region1: #{tpu_custom_call.1} parent=0
    #allocation4 [shape = 'u8[65536]{0}', space=vmem, size = 0x10000, scoped, tag = 'input window, operand 2, single buffered']
    #allocation5 [shape = 's32[1]{0}', space=sflag, size = 0x4, scoped, tag = 'scoped memory for tpu_custom_call.1']
    #allocation6 [shape = 's32[1]{0}', space=sflag, size = 0x4, scoped, tag = 'scoped memory for tpu_custom_call.1']
    #allocation7 [shape = 'u8[65536]{0}', space=vmem, size = 0x10000, scoped, tag = 'input window, operand 4, single buffered']
    #allocation8 [shape = 's32[1]{0}', space=sflag, size = 0x4, scoped, tag = 'scoped memory for tpu_custom_call.1']
    #allocation9 [shape = 'u8[4096]{0}', space=vmem, size = 0x1000, scoped, tag = 'output window, operand 0, single buffered']
    %11 = vsyncpa [#allocation5], 0
    %12 = vsyncpa [#allocation8], 0
    %13 = vsyncpa [#allocation6], 0
    // Predicated region
    $region2: #{tpu_custom_call.1} parent=1 // pred_check
      _
    $region3: #{tpu_custom_call.1} parent=1 // pred_check_branch
      %15 = sbr.rel (0) target = $region5
    $region4: #{tpu_custom_call.1} parent=1 // pred_region
      _
    $region5: #{tpu_custom_call.1} parent=1 // pred_fallthru
      _
    // Predicated region
    $region6: #{tpu_custom_call.1} parent=1 // pred_check
      _
    $region7: #{tpu_custom_call.1} parent=1 // pred_check_branch
      %17 = sbr.rel (0) target = $region9
    $region8: #{tpu_custom_call.1} parent=1 // pred_region
      _
    $region9: #{tpu_custom_call.1} parent=1 // pred_fallthru
      _
    // Predicated region
    $region10: #{tpu_custom_call.1} parent=1 // pred_check
      _
    $region11: #{tpu_custom_call.1} parent=1 // pred_check_branch
      %19 = sbr.rel (0) target = $region13
    $region12: #{tpu_custom_call.1} parent=1 // pred_region
      %21 = vsyncadd [#allocation5], 0
      %s22 = sshll.u32 %s2, 4
      %s23 = int_to_ptr.hbm [resolvable:$true] %s22
      %s24 = sshll.u32 [#allocation4], 4
      %s25 = int_to_ptr.vmem [resolvable:$true] %s24
      %30 = dma.hbm_to_vmem [thread:$0]  %s23, 2048, %s25, [#allocation5], 128, 128, 8
    $region13: #{tpu_custom_call.1} parent=1 // pred_fallthru
      _
    // Predicated region
    $region14: #{tpu_custom_call.1} parent=1 // pred_check
      _
    $region15: #{tpu_custom_call.1} parent=1 // pred_check_branch
      %32 = sbr.rel (0) target = $region17
    $region16: #{tpu_custom_call.1} parent=1 // pred_region
      _
    $region17: #{tpu_custom_call.1} parent=1 // pred_fallthru
      _
    // Predicated region
    $region18: #{tpu_custom_call.1} parent=1 // pred_check
      _
    $region19: #{tpu_custom_call.1} parent=1 // pred_check_branch
      %34 = sbr.rel (0) target = $region21
    $region20: #{tpu_custom_call.1} parent=1 // pred_region
      %36 = vsyncadd [#allocation8], 0
      %s37 = sshll.u32 %s4, 4
      %s38 = int_to_ptr.hbm [resolvable:$true] %s37
      %s39 = sshll.u32 [#allocation7], 4
      %s40 = int_to_ptr.vmem [resolvable:$true] %s39
      %45 = dma.hbm_to_vmem [thread:$0]  %s38, 2048, %s40, [#allocation8], 128, 128, 8
    $region21: #{tpu_custom_call.1} parent=1 // pred_fallthru
      _
    // Predicated region
    $region22: #{tpu_custom_call.1} parent=1 // pred_check
      _
    $region23: #{tpu_custom_call.1} parent=1 // pred_check_branch
      %47 = sbr.rel (0) target = $region25
    $region24: #{tpu_custom_call.1} parent=1 // pred_region
      _
    $region25: #{tpu_custom_call.1} parent=1 // pred_fallthru
      _
    // Predicated region
    $region26: #{tpu_custom_call.1} parent=1 // pred_check
      _
    $region27: #{tpu_custom_call.1} parent=1 // pred_check_branch
      %49 = sbr.rel (0) target = $region29
    $region28: #{tpu_custom_call.1} parent=1 // pred_region
      %51 = dma.done [#allocation5], 2048
    $region29: #{tpu_custom_call.1} parent=1 // pred_fallthru
      _
    // Predicated region
    $region30: #{tpu_custom_call.1} parent=1 // pred_check
      _
    $region31: #{tpu_custom_call.1} parent=1 // pred_check_branch
      %53 = sbr.rel (0) target = $region33
    $region32: #{tpu_custom_call.1} parent=1 // pred_region
      %55 = dma.done [#allocation8], 2048
    $region33: #{tpu_custom_call.1} parent=1 // pred_fallthru
      _
    %p56 = scmp.eq.s32.totalorder 0, 0
    // Predicated region
    $region34: #{tpu_custom_call.1} parent=1 // pred_check
      %p57 = pneg %p56
    $region35: #{tpu_custom_call.1} parent=1 // pred_check_branch
      %59 = sbr.rel (%p57) target = $region37
    $region36: #{tpu_custom_call.1} parent=1 // pred_region
      %60 = vst [vmem:[#allocation2] sm:$0xff] 0.0
    $region37: #{tpu_custom_call.1} parent=1 // pred_fallthru
      _
    %v61 = vld [vmem:[%s0] sm:$0xff]
    %v62 = vld [vmem:[%s0 + $0x8] sm:$0xff]
    %v63 = vld [vmem:[%s0 + $0x10] sm:$0xff]
    %v64 = vld [vmem:[%s0 + $0x18] sm:$0xff]
    %v65 = vld [vmem:[%s0 + $0x20] sm:$0xff]
    %v66 = vld [vmem:[%s0 + $0x28] sm:$0xff]
    %v67 = vld [vmem:[%s0 + $0x30] sm:$0xff]
    %v68 = vld [vmem:[%s0 + $0x38] sm:$0xff]
    %v69 = vld [vmem:[%s1] sm:$0x1]
    %71 = vset.pattern.permute.xlu0 0
    %72 = vperm.xlu0 %71, %v61
    %v73 = vpop.permute.xlu0 %72
    %76 = vset.pattern.permute.xlu0 0
    %77 = vperm.xlu0 %76, %v62
    %v78 = vpop.permute.xlu0 %77
    %81 = vset.pattern.permute.xlu0 0
    %82 = vperm.xlu0 %81, %v63
    %v83 = vpop.permute.xlu0 %82
    %86 = vset.pattern.permute.xlu0 0
    %87 = vperm.xlu0 %86, %v64
    %v88 = vpop.permute.xlu0 %87
    %91 = vset.pattern.permute.xlu0 0
    %92 = vperm.xlu0 %91, %v65
    %v93 = vpop.permute.xlu0 %92
    %96 = vset.pattern.permute.xlu0 0
    %97 = vperm.xlu0 %96, %v66
    %v98 = vpop.permute.xlu0 %97
    %101 = vset.pattern.permute.xlu0 0
    %102 = vperm.xlu0 %101, %v67
    %v103 = vpop.permute.xlu0 %102
    %106 = vset.pattern.permute.xlu0 0
    %107 = vperm.xlu0 %106, %v68
    %v108 = vpop.permute.xlu0 %107
    %v111 = vperm.slane %v69, 0
    %v113 = vmul.f32 %v73, %v111
    %v114 = vmul.f32 %v78, %v111
    %v115 = vmul.f32 %v83, %v111
    %v116 = vmul.f32 %v88, %v111
    %v117 = vmul.f32 %v93, %v111
    %v118 = vmul.f32 %v98, %v111
    %v119 = vmul.f32 %v103, %v111
    %v120 = vmul.f32 %v108, %v111
    %v121 = vld [vmem:[%s3] sm:$0x1]
    %v123 = vperm.slane %v121, 0
    %v125 = vadd.f32 %v113, %v123
    %v126 = vadd.f32 %v114, %v123
    %v127 = vadd.f32 %v115, %v123
    %v128 = vadd.f32 %v116, %v123
    %v129 = vadd.f32 %v117, %v123
    %v130 = vadd.f32 %v118, %v123
    %v131 = vadd.f32 %v119, %v123
    %v132 = vadd.f32 %v120, %v123
    %133 = vst [vmem:[#allocation3] sm:$0xff] %v125
    %134 = vst [vmem:[#allocation3 + $0x8] sm:$0xff] %v126
    %135 = vst [vmem:[#allocation3 + $0x10] sm:$0xff] %v127
    %136 = vst [vmem:[#allocation3 + $0x18] sm:$0xff] %v128
    %137 = vst [vmem:[#allocation3 + $0x20] sm:$0xff] %v129
    %138 = vst [vmem:[#allocation3 + $0x28] sm:$0xff] %v130
    %139 = vst [vmem:[#allocation3 + $0x30] sm:$0xff] %v131
    %140 = vst [vmem:[#allocation3 + $0x38] sm:$0xff] %v132
    %v141 = vld [vmem:[#allocation4] sm:$0xff]
    %v142 = vld [vmem:[#allocation4 + $0x8] sm:$0xff]
    %v143 = vld [vmem:[#allocation4 + $0x10] sm:$0xff]
    %v144 = vld [vmem:[#allocation4 + $0x18] sm:$0xff]
    %v145 = vld [vmem:[#allocation4 + $0x20] sm:$0xff]
    %v146 = vld [vmem:[#allocation4 + $0x28] sm:$0xff]
    %v147 = vld [vmem:[#allocation4 + $0x30] sm:$0xff]
    %v148 = vld [vmem:[#allocation4 + $0x38] sm:$0xff]
    %v149 = vld [vmem:[#allocation4 + $0x40] sm:$0xff]
    %v150 = vld [vmem:[#allocation4 + $0x48] sm:$0xff]
    %v151 = vld [vmem:[#allocation4 + $0x50] sm:$0xff]
    %v152 = vld [vmem:[#allocation4 + $0x58] sm:$0xff]
    %v153 = vld [vmem:[#allocation4 + $0x60] sm:$0xff]
    %v154 = vld [vmem:[#allocation4 + $0x68] sm:$0xff]
    %v155 = vld [vmem:[#allocation4 + $0x70] sm:$0xff]
    %v156 = vld [vmem:[#allocation4 + $0x78] sm:$0xff]
    %v157 = vld [vmem:[#allocation2] sm:$0xff]
    %v158 = vld [vmem:[#allocation3] sm:$0xff]
    %159 = vmatpush.msra.mxu0 %v156
    %160 = vmatpush.msra.mxu0 %v155
    %161 = vmatpush.msra.mxu0 %v154
    %162 = vmatpush.msra.mxu0 %v153
    %163 = vmatpush.msra.mxu0 %v152
    %164 = vmatpush.msra.mxu0 %v151
    %165 = vmatpush.msra.mxu0 %v150
    %166 = vmatpush.msra.mxu0 %v149
    %167 = vmatpush.msra.mxu0 %v148
    %168 = vmatpush.msra.mxu0 %v147
    %169 = vmatpush.msra.mxu0 %v146
    %170 = vmatpush.msra.mxu0 %v145
    %171 = vmatpush.msra.mxu0 %v144
    %172 = vmatpush.msra.mxu0 %v143
    %173 = vmatpush.msra.mxu0 %v142
    %174 = vmatpush.msra.mxu0 %v141
    %175 = vmatmul.f32.gmra.mxu0 %v157
    %v176 = vpop.f32.mrf.mxu0
    %v177 = vadd.f32 0.0, %v176
    %178 = vdwg.mxu0
    %v179 = vadd.f32 %v158, %v177
    %v180 = vtanh.pop %v179
    %s181 = scalar_lea.vmem [#allocation3], 8
    %v182 = vld [vmem:[%s181] sm:$0xff]
    %183 = vmatpush.msra.mxu0 %v156
    %184 = vmatpush.msra.mxu0 %v155
    %185 = vmatpush.msra.mxu0 %v154
    %186 = vmatpush.msra.mxu0 %v153
    %187 = vmatpush.msra.mxu0 %v152
    %188 = vmatpush.msra.mxu0 %v151
    %189 = vmatpush.msra.mxu0 %v150
    %190 = vmatpush.msra.mxu0 %v149
    %191 = vmatpush.msra.mxu0 %v148
    %192 = vmatpush.msra.mxu0 %v147
    %193 = vmatpush.msra.mxu0 %v146
    %194 = vmatpush.msra.mxu0 %v145
    %195 = vmatpush.msra.mxu0 %v144
    %196 = vmatpush.msra.mxu0 %v143
    %197 = vmatpush.msra.mxu0 %v142
    %198 = vmatpush.msra.mxu0 %v141
    %199 = vmatmul.f32.gmra.mxu0 %v180
    %v200 = vpop.f32.mrf.mxu0
    %v201 = vadd.f32 0.0, %v200
    %202 = vdwg.mxu0
    %v203 = vadd.f32 %v182, %v201
    %v204 = vtanh.pop %v203
    %s205 = scalar_lea.vmem [#allocation3], 16
    %v206 = vld [vmem:[%s205] sm:$0xff]
    %207 = vmatpush.msra.mxu0 %v156
    %208 = vmatpush.msra.mxu0 %v155
    %209 = vmatpush.msra.mxu0 %v154
    %210 = vmatpush.msra.mxu0 %v153
    %211 = vmatpush.msra.mxu0 %v152
    %212 = vmatpush.msra.mxu0 %v151
    %213 = vmatpush.msra.mxu0 %v150
    %214 = vmatpush.msra.mxu0 %v149
    %215 = vmatpush.msra.mxu0 %v148
    %216 = vmatpush.msra.mxu0 %v147
    %217 = vmatpush.msra.mxu0 %v146
    %218 = vmatpush.msra.mxu0 %v145
    %219 = vmatpush.msra.mxu0 %v144
    %220 = vmatpush.msra.mxu0 %v143
    %221 = vmatpush.msra.mxu0 %v142
    %222 = vmatpush.msra.mxu0 %v141
    %223 = vmatmul.f32.gmra.mxu0 %v204
    %v224 = vpop.f32.mrf.mxu0
    %v225 = vadd.f32 0.0, %v224
    %226 = vdwg.mxu0
    %v227 = vadd.f32 %v206, %v225
    %v228 = vtanh.pop %v227
    %s229 = scalar_lea.vmem [#allocation3], 24
    %v230 = vld [vmem:[%s229] sm:$0xff]
    %231 = vmatpush.msra.mxu0 %v156
    %232 = vmatpush.msra.mxu0 %v155
    %233 = vmatpush.msra.mxu0 %v154
    %234 = vmatpush.msra.mxu0 %v153
    %235 = vmatpush.msra.mxu0 %v152
    %236 = vmatpush.msra.mxu0 %v151
    %237 = vmatpush.msra.mxu0 %v150
    %238 = vmatpush.msra.mxu0 %v149
    %239 = vmatpush.msra.mxu0 %v148
    %240 = vmatpush.msra.mxu0 %v147
    %241 = vmatpush.msra.mxu0 %v146
    %242 = vmatpush.msra.mxu0 %v145
    %243 = vmatpush.msra.mxu0 %v144
    %244 = vmatpush.msra.mxu0 %v143
    %245 = vmatpush.msra.mxu0 %v142
    %246 = vmatpush.msra.mxu0 %v141
    %247 = vmatmul.f32.gmra.mxu0 %v228
    %v248 = vpop.f32.mrf.mxu0
    %v249 = vadd.f32 0.0, %v248
    %250 = vdwg.mxu0
    %v251 = vadd.f32 %v230, %v249
    %v252 = vtanh.pop %v251
    %s253 = scalar_lea.vmem [#allocation3], 32
    %v254 = vld [vmem:[%s253] sm:$0xff]
    %255 = vmatpush.msra.mxu0 %v156
    %256 = vmatpush.msra.mxu0 %v155
    %257 = vmatpush.msra.mxu0 %v154
    %258 = vmatpush.msra.mxu0 %v153
    %259 = vmatpush.msra.mxu0 %v152
    %260 = vmatpush.msra.mxu0 %v151
    %261 = vmatpush.msra.mxu0 %v150
    %262 = vmatpush.msra.mxu0 %v149
    %263 = vmatpush.msra.mxu0 %v148
    %264 = vmatpush.msra.mxu0 %v147
    %265 = vmatpush.msra.mxu0 %v146
    %266 = vmatpush.msra.mxu0 %v145
    %267 = vmatpush.msra.mxu0 %v144
    %268 = vmatpush.msra.mxu0 %v143
    %269 = vmatpush.msra.mxu0 %v142
    %270 = vmatpush.msra.mxu0 %v141
    %271 = vmatmul.f32.gmra.mxu0 %v252
    %v272 = vpop.f32.mrf.mxu0
    %v273 = vadd.f32 0.0, %v272
    %274 = vdwg.mxu0
    %v275 = vadd.f32 %v254, %v273
    %v276 = vtanh.pop %v275
    %s277 = scalar_lea.vmem [#allocation3], 40
    %v278 = vld [vmem:[%s277] sm:$0xff]
    %279 = vmatpush.msra.mxu0 %v156
    %280 = vmatpush.msra.mxu0 %v155
    %281 = vmatpush.msra.mxu0 %v154
    %282 = vmatpush.msra.mxu0 %v153
    %283 = vmatpush.msra.mxu0 %v152
    %284 = vmatpush.msra.mxu0 %v151
    %285 = vmatpush.msra.mxu0 %v150
    %286 = vmatpush.msra.mxu0 %v149
    %287 = vmatpush.msra.mxu0 %v148
    %288 = vmatpush.msra.mxu0 %v147
    %289 = vmatpush.msra.mxu0 %v146
    %290 = vmatpush.msra.mxu0 %v145
    %291 = vmatpush.msra.mxu0 %v144
    %292 = vmatpush.msra.mxu0 %v143
    %293 = vmatpush.msra.mxu0 %v142
    %294 = vmatpush.msra.mxu0 %v141
    %295 = vmatmul.f32.gmra.mxu0 %v276
    %v296 = vpop.f32.mrf.mxu0
    %v297 = vadd.f32 0.0, %v296
    %298 = vdwg.mxu0
    %v299 = vadd.f32 %v278, %v297
    %v300 = vtanh.pop %v299
    %s301 = scalar_lea.vmem [#allocation3], 48
    %v302 = vld [vmem:[%s301] sm:$0xff]
    %303 = vmatpush.msra.mxu0 %v156
    %304 = vmatpush.msra.mxu0 %v155
    %305 = vmatpush.msra.mxu0 %v154
    %306 = vmatpush.msra.mxu0 %v153
    %307 = vmatpush.msra.mxu0 %v152
    %308 = vmatpush.msra.mxu0 %v151
    %309 = vmatpush.msra.mxu0 %v150
    %310 = vmatpush.msra.mxu0 %v149
    %311 = vmatpush.msra.mxu0 %v148
    %312 = vmatpush.msra.mxu0 %v147
    %313 = vmatpush.msra.mxu0 %v146
    %314 = vmatpush.msra.mxu0 %v145
    %315 = vmatpush.msra.mxu0 %v144
    %316 = vmatpush.msra.mxu0 %v143
    %317 = vmatpush.msra.mxu0 %v142
    %318 = vmatpush.msra.mxu0 %v141
    %319 = vmatmul.f32.gmra.mxu0 %v300
    %v320 = vpop.f32.mrf.mxu0
    %v321 = vadd.f32 0.0, %v320
    %322 = vdwg.mxu0
    %v323 = vadd.f32 %v302, %v321
    %v324 = vtanh.pop %v323
    %s325 = scalar_lea.vmem [#allocation3], 56
    %v326 = vld [vmem:[%s325] sm:$0xff]
    %327 = vmatpush.msra.mxu0 %v156
    %328 = vmatpush.msra.mxu0 %v155
    %329 = vmatpush.msra.mxu0 %v154
    %330 = vmatpush.msra.mxu0 %v153
    %331 = vmatpush.msra.mxu0 %v152
    %332 = vmatpush.msra.mxu0 %v151
    %333 = vmatpush.msra.mxu0 %v150
    %334 = vmatpush.msra.mxu0 %v149
    %335 = vmatpush.msra.mxu0 %v148
    %336 = vmatpush.msra.mxu0 %v147
    %337 = vmatpush.msra.mxu0 %v146
    %338 = vmatpush.msra.mxu0 %v145
    %339 = vmatpush.msra.mxu0 %v144
    %340 = vmatpush.msra.mxu0 %v143
    %341 = vmatpush.msra.mxu0 %v142
    %342 = vmatpush.msra.mxu0 %v141
    %343 = vmatmul.f32.gmra.mxu0 %v324
    %v344 = vpop.f32.mrf.mxu0
    %v345 = vadd.f32 0.0, %v344
    %346 = vdwg.mxu0
    %v347 = vadd.f32 %v326, %v345
    %v348 = vtanh.pop %v347
    %349 = vst [vmem:[#allocation2] sm:$0xff] %v348
    // Predicated region
    $region38: #{tpu_custom_call.1} parent=1 // pred_check
      %p350 = pneg %p56
    $region39: #{tpu_custom_call.1} parent=1 // pred_check_branch
      %352 = sbr.rel (%p350) target = $region41
    $region40: #{tpu_custom_call.1} parent=1 // pred_region
      %v353 = vld [vmem:[#allocation7] sm:$0xff]
      %v354 = vld [vmem:[#allocation7 + $0x8] sm:$0xff]
      %v355 = vld [vmem:[#allocation7 + $0x10] sm:$0xff]
      %v356 = vld [vmem:[#allocation7 + $0x18] sm:$0xff]
      %v357 = vld [vmem:[#allocation7 + $0x20] sm:$0xff]
      %v358 = vld [vmem:[#allocation7 + $0x28] sm:$0xff]
      %v359 = vld [vmem:[#allocation7 + $0x30] sm:$0xff]
      %v360 = vld [vmem:[#allocation7 + $0x38] sm:$0xff]
      %v361 = vld [vmem:[#allocation7 + $0x40] sm:$0xff]
      %v362 = vld [vmem:[#allocation7 + $0x48] sm:$0xff]
      %v363 = vld [vmem:[#allocation7 + $0x50] sm:$0xff]
      %v364 = vld [vmem:[#allocation7 + $0x58] sm:$0xff]
      %v365 = vld [vmem:[#allocation7 + $0x60] sm:$0xff]
      %v366 = vld [vmem:[#allocation7 + $0x68] sm:$0xff]
      %v367 = vld [vmem:[#allocation7 + $0x70] sm:$0xff]
      %v368 = vld [vmem:[#allocation7 + $0x78] sm:$0xff]
      %v369 = vld [vmem:[%s5] sm:$0x1]
      %v371 = vperm.slane %v369, 0
      %373 = vmatpush.msra.mxu0 %v368
      %374 = vmatpush.msra.mxu0 %v367
      %375 = vmatpush.msra.mxu0 %v366
      %376 = vmatpush.msra.mxu0 %v365
      %377 = vmatpush.msra.mxu0 %v364
      %378 = vmatpush.msra.mxu0 %v363
      %379 = vmatpush.msra.mxu0 %v362
      %380 = vmatpush.msra.mxu0 %v361
      %381 = vmatpush.msra.mxu0 %v360
      %382 = vmatpush.msra.mxu0 %v359
      %383 = vmatpush.msra.mxu0 %v358
      %384 = vmatpush.msra.mxu0 %v357
      %385 = vmatpush.msra.mxu0 %v356
      %386 = vmatpush.msra.mxu0 %v355
      %387 = vmatpush.msra.mxu0 %v354
      %388 = vmatpush.msra.mxu0 %v353
      %389 = vmatmul.f32.gmra.mxu0 %v348
      %v390 = vpop.f32.mrf.mxu0
      %v391 = vadd.f32 %v371, %v390
      %392 = vdwg.mxu0
      %393 = vst [vmem:[#allocation9] sm:$0xff] %v391
    $region41: #{tpu_custom_call.1} parent=1 // pred_fallthru
      _
    // Predicated region
    $region42: #{tpu_custom_call.1} parent=1 // pred_check
      _
    $region43: #{tpu_custom_call.1} parent=1 // pred_check_branch
      %395 = sbr.rel (0) target = $region45
    $region44: #{tpu_custom_call.1} parent=1 // pred_region
      %397 = vsyncadd [#allocation6], 0
      %s399 = sshll.u32 [#allocation9], 4
      %s400 = int_to_ptr.vmem [resolvable:$true] %s399
      %s401 = sshll.u32 %s6, 4
      %s402 = int_to_ptr.hbm [resolvable:$true] %s401
      %404 = dma.vmem_to_hbm [thread:$0]  %s400, 128, %s402, [#allocation6]
    $region45: #{tpu_custom_call.1} parent=1 // pred_fallthru
      _
    // Predicated region
    $region46: #{tpu_custom_call.1} parent=1 // pred_check
      _
    $region47: #{tpu_custom_call.1} parent=1 // pred_check_branch
      %406 = sbr.rel (0) target = $region49
    $region48: #{tpu_custom_call.1} parent=1 // pred_region
      %408 = dma.done [#allocation6], 128
    $region49: #{tpu_custom_call.1} parent=1 // pred_fallthru
      _
    %409 = vsyncpa [#allocation5], 1
    %410 = vsyncpa [#allocation8], 1
    %411 = vsyncpa [#allocation6], 1

</llo_original>
